<compile_context>
chip_gen: v7x
topology: tpu7x:2x2x1
jax: 0.10.0
libtpu: 0.0.40
codegen_flags: <defaults>
</compile_context>

<pallas_src>
import functools

import jax
import jax.numpy as jnp
from jax.experimental import pallas as pl
from jax.experimental.pallas import tpu as pltpu

BN_EPS = 1e-5
LW = 128  # lane width


def _vmem_budget():
    """Returns (tile_budget_bytes, vmem_limit_bytes) for this TPU generation."""
    cap = 64 * 1024 * 1024
    try:
        info = pltpu.get_tpu_info()
        cap = int(getattr(info, "vmem_capacity_bytes", cap))
    except Exception:
        pass
    if cap >= 100 * 1024 * 1024:        # v5e / v6e: 128 MiB physical VMEM
        return 72 * 1024 * 1024, 100 * 1024 * 1024
    # v7x (64 MiB physical) or unknown: stay conservative.
    return 32 * 1024 * 1024, 46 * 1024 * 1024


def _pick_lane_tile(hw_pad, per_lane_bytes, budget_bytes):
    """Largest multiple of 128 dividing hw_pad whose per-step bytes fit budget."""
    t_max = max(LW, (budget_bytes // max(per_lane_bytes, 1)) // LW * LW)
    for k in range(hw_pad // LW, 0, -1):
        t = k * LW
        if hw_pad % t == 0 and t <= t_max:
            return t
    return LW


def _lane_fold(y):
    """(C, T) -> (C, 128): sum 128-lane groups with static, aligned slices."""
    t = y.shape[-1]
    acc = y[:, :LW]
    for j in range(1, t // LW):
        acc = acc + y[:, j * LW:(j + 1) * LW]
    return acc


# ---------------------------------------------------------------------------
# Pass 1: per-channel (lane-wide) sum / sum-of-squares of the two 1x1 convs.
# Grid = (NC, N, tiles_per_core); leading axis is the (v7x) core split.
# ---------------------------------------------------------------------------
def _stats_kernel(g_ref, x_ref, wg_ref, wx_ref,
                  sg_ref, ssg_ref, sx_ref, ssx_ref):
    @pl.when((pl.program_id(1) == 0) & (pl.program_id(2) == 0))
    def _():
        sg_ref[...] = jnp.zeros_like(sg_ref)
        ssg_ref[...] = jnp.zeros_like(ssg_ref)
        sx_ref[...] = jnp.zeros_like(sx_ref)
        ssx_ref[...] = jnp.zeros_like(ssx_ref)

    yg = jnp.dot(wg_ref[...], g_ref[0], preferred_element_type=jnp.float32)
    yx = jnp.dot(wx_ref[...], x_ref[0], preferred_element_type=jnp.float32)
    sg_ref[0] += _lane_fold(yg)
    ssg_ref[0] += _lane_fold(yg * yg)
    sx_ref[0] += _lane_fold(yx)
    ssx_ref[0] += _lane_fold(yx * yx)


# ---------------------------------------------------------------------------
# Pass 2: psi logits z = wpsi . relu((scg*Wg)@g + (scx*Wx)@x + sh) plus the
# lane-wide (sum, sumsq) of z for the final single-channel BatchNorm.
# ---------------------------------------------------------------------------
def _psi_kernel(g_ref, x_ref, wg_ref, wx_ref, wpsi_ref, sh_ref,
                z_ref, sz_ref, ssz_ref, *, hw, tpc, needs_mask):
    @pl.when((pl.program_id(1) == 0) & (pl.program_id(2) == 0))
    def _():
        sz_ref[...] = jnp.zeros_like(sz_ref)
        ssz_ref[...] = jnp.zeros_like(ssz_ref)

    y = (jnp.dot(wg_ref[...], g_ref[0], preferred_element_type=jnp.float32)
         + jnp.dot(wx_ref[...], x_ref[0], preferred_element_type=jnp.float32)
         + sh_ref[...])                               # BN fused into W + shift
    p = jnp.maximum(y, 0.0)                           # (F_int, T)
    # F_int -> 1 projection as VPU multiply + sublane reduce (MXU stays free).
    z = jnp.sum(p * wpsi_ref[...], axis=0, keepdims=True)   # (1, T) f32
    if needs_mask:
        t = z.shape[-1]
        start = (pl.program_id(0) * tpc + pl.program_id(2)) * t
        lane = jax.lax.broadcasted_iota(jnp.int32, z.shape, 1) + start
        z = jnp.where(lane < hw, z, 0.0)              # zero padded lanes
    z_ref[0] = z.astype(z_ref.dtype)
    sz_ref[0] += _lane_fold(z)
    ssz_ref[0] += _lane_fold(z * z)


# ---------------------------------------------------------------------------
# Pass 3: out = x * sigmoid(BN(z))   (fully parallel over the grid).
# ---------------------------------------------------------------------------
def _gate_kernel(x_ref, z_ref, scp_ref, shp_ref, o_ref):
    psi = jax.nn.sigmoid(z_ref[0].astype(jnp.float32) * scp_ref[...]
                         + shp_ref[...])              # (1, T) f32
    o_ref[0] = (x_ref[0] * psi.astype(x_ref.dtype)).astype(o_ref.dtype)


def attention_block(g, x, params):
    """g: (N, F_l, H, W); x: (N, F_g, H, W) in NCHW.  Returns (N, F_g, H, W)."""
    N, F_l, H, W = g.shape
    _, F_g, _, _ = x.shape
    act = x.dtype
    wg = params["wg"].astype(jnp.float32)      # (F_int, F_l)
    wx = params["wx"].astype(jnp.float32)      # (F_int, F_g)
    wpsi = params["wpsi"].astype(jnp.float32)  # (F_int, 1)
    F_int = wg.shape[0]
    HW = H * W
    M = float(N * HW)                          # BatchNorm population size

    HW_pad = ((HW + LW - 1) // LW) * LW
    pad = HW_pad - HW
    needs_mask = pad > 0

    # Free reshapes (no transposes): lane axis is the spatial H*W axis.
    g3 = g.reshape(N, F_l, HW).astype(act)
    x3 = x.reshape(N, F_g, HW).astype(act)
    if pad:
        g3 = jnp.pad(g3, ((0, 0), (0, 0), (0, pad)))
        x3 = jnp.pad(x3, ((0, 0), (0, 0), (0, pad)))

    # Lane tile from VMEM budget: double-buffered g/x (+x/out/z in pass 3) tiles
    # plus f32 (F_int, T) matmul/relu temporaries.
    in_b = jnp.dtype(act).itemsize
    per_lane = 2 * (F_l + 2 * F_g) * in_b + 4 * in_b + 4 * F_int * 4
    tile_budget, vmem_limit = _vmem_budget()
    T = _pick_lane_tile(HW_pad, per_lane, tile_budget)
    num_t = HW_pad // T
    NC = 2 if num_t % 2 == 0 else 1            # dual-TensorCore split (v7x)
    tpc = num_t // NC                          # spatial tiles per core

    wg_a = wg.astype(act)
    wx_a = wx.astype(act)

    def tile3(c):        # activation tile, core-split along the spatial axis
        return pl.BlockSpec((1, c, T), lambda ci, n, t: (n, 0, ci * tpc + t))

    def small3(shape):   # small resident parameter block
        zeros = (0,) * len(shape)
        return pl.BlockSpec(shape, lambda ci, n, t: zeros)

    def acc3(rows):      # per-core lane-wide accumulator slot
        return pl.BlockSpec((1, rows, LW), lambda ci, n, t: (ci, 0, 0))

    seq_params = pltpu.CompilerParams(
        dimension_semantics=("parallel", "arbitrary", "arbitrary"),
        vmem_limit_bytes=vmem_limit)
    par_params = pltpu.CompilerParams(
        dimension_semantics=("parallel", "parallel"),
        vmem_limit_bytes=vmem_limit)

    grid3 = (NC, N, tpc)

    # -------- pass 1: accumulate per-channel lane-wide sum / sumsq -----------
    acc_fint = jax.ShapeDtypeStruct((NC, F_int, LW), jnp.float32)
    sg, ssg, sx, ssx = pl.pallas_call(
        _stats_kernel,
        grid=grid3,
        in_specs=[tile3(F_l), tile3(F_g),
                  small3((F_int, F_l)), small3((F_int, F_g))],
        out_specs=[acc3(F_int)] * 4,
        out_shape=[acc_fint] * 4,
        compiler_params=seq_params,
    )(g3, x3, wg_a, wx_a)

    def reduce_acc(a, rows):       # (NC, rows, 128) -> (rows, 1)
        return jnp.sum(a, axis=(0, 2)).reshape(rows, 1)

    def finalize(s, ss, gamma, beta):
        mean = s / M
        var = jnp.maximum(ss / M - mean * mean, 0.0)      # biased variance
        scale = gamma.astype(jnp.float32) * jax.lax.rsqrt(var + BN_EPS)
        return scale, beta.astype(jnp.float32) - mean * scale

    scg, shg = finalize(reduce_acc(sg, F_int), reduce_acc(ssg, F_int),
                        params["gamma_g"], params["beta_g"])
    scx, shx = finalize(reduce_acc(sx, F_int), reduce_acc(ssx, F_int),
                        params["gamma_x"], params["beta_x"])

    # Fold the finalized BN scales into the conv weights; combine the shifts.
    wg2 = (scg * wg).astype(act)
    wx2 = (scx * wx).astype(act)
    sh = (shg + shx).astype(jnp.float32)       # (F_int, 1)

    # -------- pass 2: psi logits + their stats --------------------------------
    psi_kernel = functools.partial(_psi_kernel, hw=HW, tpc=tpc,
                                   needs_mask=needs_mask)
    z, sz, ssz = pl.pallas_call(
        psi_kernel,
        grid=grid3,
        in_specs=[tile3(F_l), tile3(F_g),
                  small3((F_int, F_l)), small3((F_int, F_g)),
                  small3((F_int, 1)), small3((F_int, 1))],
        out_specs=[tile3(1), acc3(1), acc3(1)],
        out_shape=[jax.ShapeDtypeStruct((N, 1, HW_pad), act),
                   jax.ShapeDtypeStruct((NC, 1, LW), jnp.float32),
                   jax.ShapeDtypeStruct((NC, 1, LW), jnp.float32)],
        compiler_params=seq_params,
    )(g3, x3, wg2, wx2, wpsi, sh)

    scp, shp = finalize(reduce_acc(sz, 1), reduce_acc(ssz, 1),
                        params["gamma_psi"], params["beta_psi"])

    # -------- pass 3: gate -----------------------------------------------------
    def tile2(c):
        return pl.BlockSpec((1, c, T), lambda n, t: (n, 0, t))

    def small2(shape):
        zeros = (0,) * len(shape)
        return pl.BlockSpec(shape, lambda n, t: zeros)

    out = pl.pallas_call(
        _gate_kernel,
        grid=(N, num_t),
        in_specs=[tile2(F_g), tile2(1), small2((1, 1)), small2((1, 1))],
        out_specs=tile2(F_g),
        out_shape=jax.ShapeDtypeStruct((N, F_g, HW_pad), x.dtype),
        compiler_params=par_params,
    )(x3, z, scp, shp)

    if pad:
        out = out[:, :, :HW]
    return out.reshape(N, F_g, H, W)


def init_params(key, F_g, F_l, F_int, dtype=jnp.float32):
    """Synthetic parameters matching the PyTorch module shapes.

    Conv2d 1x1 weights (out, in, 1, 1) are stored squeezed as (out, in) for
    W_g / W_x and as an (F_int, 1) column for psi.  Conv biases are kept only
    for the pure-JAX reference; the kernels drop them (cancelled by BN)."""
    k = jax.random.split(key, 12)
    return {
        # W_g: Conv2d(F_l -> F_int) + BN(F_int)
        "wg": jax.random.normal(k[0], (F_int, F_l), dtype) * 0.1,
        "bg": jax.random.normal(k[1], (F_int, 1), dtype) * 0.1,
        "gamma_g": 1.0 + 0.1 * jax.random.normal(k[2], (F_int, 1), dtype),
        "beta_g": 0.1 * jax.random.normal(k[3], (F_int, 1), dtype),
        # W_x: Conv2d(F_g -> F_int) + BN(F_int)
        "wx": jax.random.normal(k[4], (F_int, F_g), dtype) * 0.1,
        "bx": jax.random.normal(k[5], (F_int, 1), dtype) * 0.1,
        "gamma_x": 1.0 + 0.1 * jax.random.normal(k[6], (F_int, 1), dtype),
        "beta_x": 0.1 * jax.random.normal(k[7], (F_int, 1), dtype),
        # psi: Conv2d(F_int -> 1) + BN(1)
        "wpsi": jax.random.normal(k[8], (F_int, 1), dtype) * 0.1,
        "bpsi": jax.random.normal(k[9], (1, 1), dtype) * 0.1,
        "gamma_psi": 1.0 + 0.1 * jax.random.normal(k[10], (1, 1), dtype),
        "beta_psi": 0.1 * jax.random.normal(k[11], (1, 1), dtype),
    }


def attention_block_ref(g, x, params, eps=BN_EPS):
    """Pure-JAX NCHW reference with the exact PyTorch-module math (including
    the conv biases, which training-mode BatchNorm cancels)."""
    def bn(y, gamma, beta):
        mean = jnp.mean(y, axis=(0, 2, 3), keepdims=True)
        var = jnp.mean(jnp.square(y - mean), axis=(0, 2, 3), keepdims=True)
        return ((y - mean) * jax.lax.rsqrt(var + eps)
                * gamma.reshape(1, -1, 1, 1) + beta.reshape(1, -1, 1, 1))

    def conv1x1(y, w, b):  # w: (Cout, Cin), b: (Cout, 1)
        return jnp.einsum("oc,nchw->nohw", w, y) + b.reshape(1, -1, 1, 1)

    g1 = bn(conv1x1(g, params["wg"], params["bg"]),
            params["gamma_g"], params["beta_g"])
    x1 = bn(conv1x1(x, params["wx"], params["bx"]),
            params["gamma_x"], params["beta_x"])
    p = jnp.maximum(g1 + x1, 0.0)
    z = conv1x1(p, params["wpsi"].T, params["bpsi"])
    psi = jax.nn.sigmoid(bn(z, params["gamma_psi"], params["beta_psi"]))
    return x * psi


if __name__ == "__main__":
    key = jax.random.PRNGKey(0)
    kg, kx, kp = jax.random.split(key, 3)

    # Small shapes: batch=2, channels F_g=F_l=4, spatial=16x16, F_int=8
    N, F_g, F_l, F_int, H, W = 2, 4, 4, 8, 16, 16
    g = jax.random.normal(kg, (N, F_l, H, W), jnp.float32)
    x = jax.random.normal(kx, (N, F_g, H, W), jnp.float32)
    params = init_params(kp, F_g, F_l, F_int)

    out = jax.block_until_ready(attention_block(g, x, params))

    ref = attention_block_ref(g, x, params)
    assert out.shape == x.shape
    max_err = float(jnp.max(jnp.abs(out - ref)))
    assert jnp.allclose(out, ref, atol=1e-4, rtol=1e-4), max_err

    print("KERNEL_OK")
</pallas_src>

<mosaic_0001>
module attributes {stable_mosaic.version = 11 : i64} {
  func.func @_stats_kernel(%arg0: i32, %arg1: i32, %arg2: i32, %arg3: memref<1x4x256xf32, #tpu.memory_space<vmem>>, %arg4: memref<1x4x256xf32, #tpu.memory_space<vmem>>, %arg5: memref<8x4xf32, #tpu.memory_space<vmem>>, %arg6: memref<8x4xf32, #tpu.memory_space<vmem>>, %arg7: memref<1x8x128xf32, #tpu.memory_space<vmem>>, %arg8: memref<1x8x128xf32, #tpu.memory_space<vmem>>, %arg9: memref<1x8x128xf32, #tpu.memory_space<vmem>>, %arg10: memref<1x8x128xf32, #tpu.memory_space<vmem>>) attributes {dimension_semantics = [#tpu.dimension_semantics<parallel>, #tpu.dimension_semantics<arbitrary>, #tpu.dimension_semantics<arbitrary>], iteration_bounds = array<i64: 1, 2, 1>, scalar_prefetch = 0 : i64, scratch_operands = 0 : i64, tpu.core_type = #tpu.core_type<tc>, window_params = [{transform_indices = @transform_0, window_bounds = array<i64: 1, 4, 256>}, {transform_indices = @transform_1, window_bounds = array<i64: 1, 4, 256>}, {pipeline_mode = #tpu.pipeline_mode<synchronous>, transform_indices = @transform_2, window_bounds = array<i64: 8, 4>}, {pipeline_mode = #tpu.pipeline_mode<synchronous>, transform_indices = @transform_3, window_bounds = array<i64: 8, 4>}, {transform_indices = @transform_4, window_bounds = array<i64: 1, 8, 128>}, {transform_indices = @transform_5, window_bounds = array<i64: 1, 8, 128>}, {transform_indices = @transform_6, window_bounds = array<i64: 1, 8, 128>}, {transform_indices = @transform_7, window_bounds = array<i64: 1, 8, 128>}]} {
    %c0_i32 = arith.constant 0 : i32
    %0 = arith.cmpi eq, %arg1, %c0_i32 : i32
    %c0_i32_0 = arith.constant 0 : i32
    %1 = arith.cmpi eq, %arg2, %c0_i32_0 : i32
    %2 = arith.andi %0, %1 : i1
    %3 = arith.extui %2 : i1 to i32
    %c0_i32_1 = arith.constant 0 : i32
    %4 = arith.cmpi ne, %3, %c0_i32_1 : i32
    scf.if %4 {
      %cst_36 = arith.constant 0.000000e+00 : f32
      %51 = vector.broadcast %cst_36 : f32 to vector<1x8x128xf32>
      %c0_37 = arith.constant 0 : index
      %c0_38 = arith.constant 0 : index
      %c0_39 = arith.constant 0 : index
      %52 = vector.load %arg7[%c0_37, %c0_38, %c0_39] : memref<1x8x128xf32, #tpu.memory_space<vmem>>, vector<1x8x128xf32>
      tpu.vector_store %arg7[%c0_37, %c0_38, %c0_39], %51 {strides = array<i32>} : memref<1x8x128xf32, #tpu.memory_space<vmem>>, vector<1x8x128xf32>,
      %cst_40 = arith.constant 0.000000e+00 : f32
      %53 = vector.broadcast %cst_40 : f32 to vector<1x8x128xf32>
      %c0_41 = arith.constant 0 : index
      %c0_42 = arith.constant 0 : index
      %c0_43 = arith.constant 0 : index
      %54 = vector.load %arg8[%c0_41, %c0_42, %c0_43] : memref<1x8x128xf32, #tpu.memory_space<vmem>>, vector<1x8x128xf32>
      tpu.vector_store %arg8[%c0_41, %c0_42, %c0_43], %53 {strides = array<i32>} : memref<1x8x128xf32, #tpu.memory_space<vmem>>, vector<1x8x128xf32>,
      %cst_44 = arith.constant 0.000000e+00 : f32
      %55 = vector.broadcast %cst_44 : f32 to vector<1x8x128xf32>
      %c0_45 = arith.constant 0 : index
      %c0_46 = arith.constant 0 : index
      %c0_47 = arith.constant 0 : index
      %56 = vector.load %arg9[%c0_45, %c0_46, %c0_47] : memref<1x8x128xf32, #tpu.memory_space<vmem>>, vector<1x8x128xf32>
      tpu.vector_store %arg9[%c0_45, %c0_46, %c0_47], %55 {strides = array<i32>} : memref<1x8x128xf32, #tpu.memory_space<vmem>>, vector<1x8x128xf32>,
      %cst_48 = arith.constant 0.000000e+00 : f32
      %57 = vector.broadcast %cst_48 : f32 to vector<1x8x128xf32>
      %c0_49 = arith.constant 0 : index
      %c0_50 = arith.constant 0 : index
      %c0_51 = arith.constant 0 : index
      %58 = vector.load %arg10[%c0_49, %c0_50, %c0_51] : memref<1x8x128xf32, #tpu.memory_space<vmem>>, vector<1x8x128xf32>
      tpu.vector_store %arg10[%c0_49, %c0_50, %c0_51], %57 {strides = array<i32>} : memref<1x8x128xf32, #tpu.memory_space<vmem>>, vector<1x8x128xf32>,
    } else {
    }
    %c0 = arith.constant 0 : index
    %c0_2 = arith.constant 0 : index
    %5 = vector.load %arg5[%c0, %c0_2] : memref<8x4xf32, #tpu.memory_space<vmem>>, vector<8x4xf32>
    %c0_3 = arith.constant 0 : index
    %c0_4 = arith.constant 0 : index
    %c0_5 = arith.constant 0 : index
    %6 = vector.load %arg3[%c0_3, %c0_4, %c0_5] : memref<1x4x256xf32, #tpu.memory_space<vmem>>, vector<1x4x256xf32>
    %7 = vector.shape_cast %6 : vector<1x4x256xf32> to vector<4x256xf32>
    %cst = arith.constant dense<0.000000e+00> : vector<8x256xf32>
    %8 = tpu.matmul %5, %7, %cst {dimension_numbers = #tpu.dot_dimension_numbers<[1], [0], [0], [1], [0, 0, 1, 1], [], []>} : vector<8x4xf32>, vector<4x256xf32>, vector<8x256xf32> -> vector<8x256xf32>
    %c0_6 = arith.constant 0 : index
    %c0_7 = arith.constant 0 : index
    %9 = vector.load %arg6[%c0_6, %c0_7] : memref<8x4xf32, #tpu.memory_space<vmem>>, vector<8x4xf32>
    %c0_8 = arith.constant 0 : index
    %c0_9 = arith.constant 0 : index
    %c0_10 = arith.constant 0 : index
    %10 = vector.load %arg4[%c0_8, %c0_9, %c0_10] : memref<1x4x256xf32, #tpu.memory_space<vmem>>, vector<1x4x256xf32>
    %11 = vector.shape_cast %10 : vector<1x4x256xf32> to vector<4x256xf32>
    %cst_11 = arith.constant dense<0.000000e+00> : vector<8x256xf32>
    %12 = tpu.matmul %9, %11, %cst_11 {dimension_numbers = #tpu.dot_dimension_numbers<[1], [0], [0], [1], [0, 0, 1, 1], [], []>} : vector<8x4xf32>, vector<4x256xf32>, vector<8x256xf32> -> vector<8x256xf32>
    %c0_12 = arith.constant 0 : index
    %c0_13 = arith.constant 0 : index
    %c0_14 = arith.constant 0 : index
    %13 = vector.load %arg7[%c0_12, %c0_13, %c0_14] : memref<1x8x128xf32, #tpu.memory_space<vmem>>, vector<1x8x128xf32>
    %14 = vector.shape_cast %13 : vector<1x8x128xf32> to vector<8x128xf32>
    %15 = vector.extract_strided_slice %8 {offsets = [0, 0], sizes = [8, 128], strides = [1, 1]} : vector<8x256xf32> to vector<8x128xf32>
    %16 = vector.extract_strided_slice %8 {offsets = [0, 128], sizes = [8, 128], strides = [1, 1]} : vector<8x256xf32> to vector<8x128xf32>
    %17 = arith.addf %15, %16 : vector<8x128xf32>
    %18 = arith.addf %14, %17 : vector<8x128xf32>
    %c0_15 = arith.constant 0 : index
    %c0_16 = arith.constant 0 : index
    %c0_17 = arith.constant 0 : index
    %19 = vector.load %arg7[%c0_15, %c0_16, %c0_17] : memref<1x8x128xf32, #tpu.memory_space<vmem>>, vector<1x8x128xf32>
    %20 = vector.shape_cast %19 : vector<1x8x128xf32> to vector<8x128xf32>
    %21 = vector.shape_cast %18 : vector<8x128xf32> to vector<1x8x128xf32>
    tpu.vector_store %arg7[%c0_15, %c0_16, %c0_17], %21 {strides = array<i32>} : memref<1x8x128xf32, #tpu.memory_space<vmem>>, vector<1x8x128xf32>,
    %c0_18 = arith.constant 0 : index
    %c0_19 = arith.constant 0 : index
    %c0_20 = arith.constant 0 : index
    %22 = vector.load %arg8[%c0_18, %c0_19, %c0_20] : memref<1x8x128xf32, #tpu.memory_space<vmem>>, vector<1x8x128xf32>
    %23 = vector.shape_cast %22 : vector<1x8x128xf32> to vector<8x128xf32>
    %24 = arith.mulf %8, %8 : vector<8x256xf32>
    %25 = vector.extract_strided_slice %24 {offsets = [0, 0], sizes = [8, 128], strides = [1, 1]} : vector<8x256xf32> to vector<8x128xf32>
    %26 = vector.extract_strided_slice %24 {offsets = [0, 128], sizes = [8, 128], strides = [1, 1]} : vector<8x256xf32> to vector<8x128xf32>
    %27 = arith.addf %25, %26 : vector<8x128xf32>
    %28 = arith.addf %23, %27 : vector<8x128xf32>
    %c0_21 = arith.constant 0 : index
    %c0_22 = arith.constant 0 : index
    %c0_23 = arith.constant 0 : index
    %29 = vector.load %arg8[%c0_21, %c0_22, %c0_23] : memref<1x8x128xf32, #tpu.memory_space<vmem>>, vector<1x8x128xf32>
    %30 = vector.shape_cast %29 : vector<1x8x128xf32> to vector<8x128xf32>
    %31 = vector.shape_cast %28 : vector<8x128xf32> to vector<1x8x128xf32>
    tpu.vector_store %arg8[%c0_21, %c0_22, %c0_23], %31 {strides = array<i32>} : memref<1x8x128xf32, #tpu.memory_space<vmem>>, vector<1x8x128xf32>,
    %c0_24 = arith.constant 0 : index
    %c0_25 = arith.constant 0 : index
    %c0_26 = arith.constant 0 : index
    %32 = vector.load %arg9[%c0_24, %c0_25, %c0_26] : memref<1x8x128xf32, #tpu.memory_space<vmem>>, vector<1x8x128xf32>
    %33 = vector.shape_cast %32 : vector<1x8x128xf32> to vector<8x128xf32>
    %34 = vector.extract_strided_slice %12 {offsets = [0, 0], sizes = [8, 128], strides = [1, 1]} : vector<8x256xf32> to vector<8x128xf32>
    %35 = vector.extract_strided_slice %12 {offsets = [0, 128], sizes = [8, 128], strides = [1, 1]} : vector<8x256xf32> to vector<8x128xf32>
    %36 = arith.addf %34, %35 : vector<8x128xf32>
    %37 = arith.addf %33, %36 : vector<8x128xf32>
    %c0_27 = arith.constant 0 : index
    %c0_28 = arith.constant 0 : index
    %c0_29 = arith.constant 0 : index
    %38 = vector.load %arg9[%c0_27, %c0_28, %c0_29] : memref<1x8x128xf32, #tpu.memory_space<vmem>>, vector<1x8x128xf32>
    %39 = vector.shape_cast %38 : vector<1x8x128xf32> to vector<8x128xf32>
    %40 = vector.shape_cast %37 : vector<8x128xf32> to vector<1x8x128xf32>
    tpu.vector_store %arg9[%c0_27, %c0_28, %c0_29], %40 {strides = array<i32>} : memref<1x8x128xf32, #tpu.memory_space<vmem>>, vector<1x8x128xf32>,
    %c0_30 = arith.constant 0 : index
    %c0_31 = arith.constant 0 : index
    %c0_32 = arith.constant 0 : index
    %41 = vector.load %arg10[%c0_30, %c0_31, %c0_32] : memref<1x8x128xf32, #tpu.memory_space<vmem>>, vector<1x8x128xf32>
    %42 = vector.shape_cast %41 : vector<1x8x128xf32> to vector<8x128xf32>
    %43 = arith.mulf %12, %12 : vector<8x256xf32>
    %44 = vector.extract_strided_slice %43 {offsets = [0, 0], sizes = [8, 128], strides = [1, 1]} : vector<8x256xf32> to vector<8x128xf32>
    %45 = vector.extract_strided_slice %43 {offsets = [0, 128], sizes = [8, 128], strides = [1, 1]} : vector<8x256xf32> to vector<8x128xf32>
    %46 = arith.addf %44, %45 : vector<8x128xf32>
    %47 = arith.addf %42, %46 : vector<8x128xf32>
    %c0_33 = arith.constant 0 : index
    %c0_34 = arith.constant 0 : index
    %c0_35 = arith.constant 0 : index
    %48 = vector.load %arg10[%c0_33, %c0_34, %c0_35] : memref<1x8x128xf32, #tpu.memory_space<vmem>>, vector<1x8x128xf32>
    %49 = vector.shape_cast %48 : vector<1x8x128xf32> to vector<8x128xf32>
    %50 = vector.shape_cast %47 : vector<8x128xf32> to vector<1x8x128xf32>
    tpu.vector_store %arg10[%c0_33, %c0_34, %c0_35], %50 {strides = array<i32>} : memref<1x8x128xf32, #tpu.memory_space<vmem>>, vector<1x8x128xf32>,
    return
  }
  func.func @transform_0(%arg0: i32, %arg1: i32, %arg2: i32) -> (i32, i32, i32) {
    %c1_i32 = arith.constant 1 : i32
    %0 = arith.muli %arg0, %c1_i32 : i32
    %1 = arith.addi %0, %arg2 : i32
    %c0_i32 = arith.constant 0 : i32
    %c0_i32_0 = arith.constant 0 : i32
    return %arg1, %c0_i32, %1 : i32, i32, i32
  }
  func.func @transform_1(%arg0: i32, %arg1: i32, %arg2: i32) -> (i32, i32, i32) {
    %c1_i32 = arith.constant 1 : i32
    %0 = arith.muli %arg0, %c1_i32 : i32
    %1 = arith.addi %0, %arg2 : i32
    %c0_i32 = arith.constant 0 : i32
    %c0_i32_0 = arith.constant 0 : i32
    return %arg1, %c0_i32, %1 : i32, i32, i32
  }
  func.func @transform_2(%arg0: i32, %arg1: i32, %arg2: i32) -> (i32, i32) {
    %c0_i32 = arith.constant 0 : i32
    %c0_i32_0 = arith.constant 0 : i32
    %c0_i32_1 = arith.constant 0 : i32
    return %c0_i32, %c0_i32_0 : i32, i32
  }
  func.func @transform_3(%arg0: i32, %arg1: i32, %arg2: i32) -> (i32, i32) {
    %c0_i32 = arith.constant 0 : i32
    %c0_i32_0 = arith.constant 0 : i32
    %c0_i32_1 = arith.constant 0 : i32
    return %c0_i32, %c0_i32_0 : i32, i32
  }
  func.func @transform_4(%arg0: i32, %arg1: i32, %arg2: i32) -> (i32, i32, i32) {
    %c0_i32 = arith.constant 0 : i32
    %c0_i32_0 = arith.constant 0 : i32
    %c0_i32_1 = arith.constant 0 : i32
    return %arg0, %c0_i32, %c0_i32_0 : i32, i32, i32
  }
  func.func @transform_5(%arg0: i32, %arg1: i32, %arg2: i32) -> (i32, i32, i32) {
    %c0_i32 = arith.constant 0 : i32
    %c0_i32_0 = arith.constant 0 : i32
    %c0_i32_1 = arith.constant 0 : i32
    return %arg0, %c0_i32, %c0_i32_0 : i32, i32, i32
  }
  func.func @transform_6(%arg0: i32, %arg1: i32, %arg2: i32) -> (i32, i32, i32) {
    %c0_i32 = arith.constant 0 : i32
    %c0_i32_0 = arith.constant 0 : i32
    %c0_i32_1 = arith.constant 0 : i32
    return %arg0, %c0_i32, %c0_i32_0 : i32, i32, i32
  }
  func.func @transform_7(%arg0: i32, %arg1: i32, %arg2: i32) -> (i32, i32, i32) {
    %c0_i32 = arith.constant 0 : i32
    %c0_i32_0 = arith.constant 0 : i32
    %c0_i32_1 = arith.constant 0 : i32
    return %arg0, %c0_i32, %c0_i32_0 : i32, i32, i32
  }
}

</mosaic_0001>

<llo_original>
// kernel: tpu_custom_call.1
$region0: #{tpu_custom_call.1}
  #allocation0 [shape = 'u32[]', space=smem, size = 0x4, offset = 0x4, fixed_abs, tag = 'smem constant byte address 0x4 - core index']
  #allocation1 [shape = 'u32[144,128]{1,0:T(1,128)}', space=vmem, size = 0x12000, scoped, tag = 'internal scratch']
  %s0 = inlined_call_operand.vmem [shape: f32[2,4,256], index: 0, kind: input, shape index: {}]
  %s1 = inlined_call_operand.hbm [shape: f32[2,4,256], index: 1, kind: input, shape index: {}]
  %s2 = inlined_call_operand.vmem [shape: f32[8,4], index: 2, kind: input, shape index: {}]
  %s3 = inlined_call_operand.vmem [shape: f32[8,4], index: 3, kind: input, shape index: {}]
  %s4 = inlined_call_operand.hbm [shape: f32[1,8,128], index: 4, kind: output, shape index: {0}]
  %s5 = inlined_call_operand.hbm [shape: f32[1,8,128], index: 5, kind: output, shape index: {1}]
  %s6 = inlined_call_operand.hbm [shape: f32[1,8,128], index: 6, kind: output, shape index: {2}]
  %s7 = inlined_call_operand.hbm [shape: f32[1,8,128], index: 7, kind: output, shape index: {3}]
  %8 = xla_tuple %s4, %s5, %s6, %s7
  %s9 = sld [smem:[#allocation0]]
  $region81: #{tpu_custom_call.1} parent=0
    _
  %s11 = ssub.s32 1, %s9
  %s12 = scalar_select 0, %s11, %s9
  $region1: #{tpu_custom_call.1} parent=0
    #allocation2 [shape = 'u8[8192]{0}', space=vmem, size = 0x2000, scoped, tag = 'input window, operand 1']
    #allocation3 [shape = 's32[2]{0}', space=sflag, size = 0x8, scoped, tag = 'scoped memory for tpu_custom_call.1']
    #allocation4 [shape = 's32[2]{0}', space=sflag, size = 0x8, scoped, tag = 'scoped memory for tpu_custom_call.1']
    #allocation5 [shape = 'u8[4096]{0}', space=vmem, size = 0x1000, scoped, tag = 'output window, operand 0, single buffered']
    #allocation6 [shape = 'u8[4096]{0}', space=vmem, size = 0x1000, scoped, tag = 'output window, operand 1, single buffered']
    #allocation7 [shape = 's32[1]{0}', space=sflag, size = 0x4, scoped, tag = 'scoped memory for tpu_custom_call.1']
    #allocation8 [shape = 'u8[4096]{0}', space=vmem, size = 0x1000, scoped, tag = 'output window, operand 2, single buffered']
    #allocation9 [shape = 'u8[4096]{0}', space=vmem, size = 0x1000, scoped, tag = 'output window, operand 3, single buffered']
    #allocation10 [shape = 's32[1]{0}', space=sflag, size = 0x4, scoped, tag = 'scoped memory for tpu_custom_call.1']
    %13 = vsyncpa [#allocation3], 0
    %s14 = scalar_lea.sflag [#allocation3], 1
    %15 = vsyncpa %s14, 0
    %16 = vsyncpa [#allocation4], 0
    %17 = vsyncpa [#allocation7], 0
    %18 = vsyncpa [#allocation10], 0
    loop: start=0, step=1, limit=4
    $region2: #{tpu_custom_call.1} parent=1 // loop_pre_header
      _
    $region3: #{tpu_custom_call.1} parent=1 // loop_header
      %s20 = sphi 0, %s24
      %p21 = scmp.ge.s32.totalorder %s20, 4
      %s27 = sphi 0, %s46
      %s28 = sphi 0, %s42
      %s29 = sphi 0, %s38
      %s30 = sphi 0, %s27
      %s31 = sphi 0, %s28
      %s32 = sphi 0, %s29
      %s33 = sphi 0, %s30
      %s34 = sphi 0, %s31
      %s35 = sphi 0, %s32
      %s53 = sphi 0, %s55
      %s56 = sphi 0, %s53
      %s57 = sphi 0, %s56
      %s73 = sphi 0, %s57
      %s83 = sphi 0, %s85
      %s86 = sphi 0, %s83
      %s87 = sphi 0, %s86
      %s103 = sphi 0, %s87
      %s107 = sphi 0, %s107
      %s109 = sphi 0, %s107
      %s110 = sphi 0, %s109
      %s124 = sphi 0, %s110
      %s128 = sphi 0, %s128
      %s130 = sphi 0, %s128
      %s131 = sphi 0, %s130
      %s145 = sphi 0, %s131
      %s151 = sphi 0, %s153
      %s154 = sphi 0, %s151
      %s155 = sphi 0, %s154
      %s171 = sphi 0, %s155
      %s177 = sphi 0, %s179
      %s180 = sphi 0, %s177
      %s181 = sphi 0, %s180
      %s197 = sphi 0, %s181
      %s203 = sphi 0, %s205
      %s206 = sphi 0, %s203
      %s207 = sphi 0, %s206
      %s223 = sphi 0, %s207
      %s229 = sphi 0, %s231
      %s232 = sphi 0, %s229
      %s233 = sphi 0, %s232
      %s249 = sphi 0, %s233
    $region4: #{tpu_custom_call.1} parent=1 // loop_header_branch
      %23 = sbr.rel (%p21) target = $region8
    $region5: #{tpu_custom_call.1} parent=1 // loop_body
      %s25 = ssub.s32 %s20, 1
      %s26 = ssub.s32 %s20, 2
      %s36 = sadd.s32 1, %s29
      %p37 = scmp.ge.s32.totalorder %s36, 1
      %s38 = scalar_select %p37, 0, %s36
      %s39 = sadd.s32 1, %s28
      %s40 = scalar_select %p37, %s39, %s28
      %p41 = scmp.ge.s32.totalorder %s40, 2
      %s42 = scalar_select %p41, 0, %s40
      %s43 = sadd.s32 1, %s27
      %s44 = scalar_select %p41, %s43, %s27
      %p45 = scmp.ge.s32.totalorder %s44, 1
      %s46 = scalar_select %p45, 0, %s44
      %s47 = sadd.s32 %s27, %s29
      %s48 = sadd.s32 %s46, %s38
      %s49 = ssub.s32 %s28, %s42
      %s50 = ssub.s32 %s47, %s48
      %s51 = sor.u32 %s49, %s50
      %p52 = scmp.eq.s32.totalorder %s51, 0
      %s54 = sadd.s32 %s53, 1
      %s55 = scalar_select %p52, %s53, %s54
      %p58 = pneg %p52
      %p59 = scmp.eq.s32.totalorder %s20, 1
      %p60 = por %p58, %p59
      %p61 = scmp.ne.s32.totalorder %s53, %s56
      %p62 = scmp.eq.s32.totalorder %s20, 0
      %p63 = por %p61, %p62
      %p64 = scmp.ne.s32.totalorder %s53, %s56
      %p65 = scmp.eq.s32.totalorder %s25, 1
      %p66 = por %p64, %p65
      %p67 = scmp.ne.s32.totalorder %s56, %s57
      %p68 = scmp.eq.s32.totalorder %s25, 0
      %p69 = por %p67, %p68
      %p70 = scmp.ne.s32.totalorder %s56, %s57
      %p71 = scmp.eq.s32.totalorder %s26, 1
      %p72 = por %p70, %p71
      %p74 = scmp.ne.s32.totalorder %s57, %s73
      %p75 = scmp.eq.s32.totalorder %s26, 0
      %p76 = por %p74, %p75
      %s77 = sadd.s32 %s27, %s29
      %s78 = sadd.s32 %s46, %s38
      %s79 = ssub.s32 %s28, %s42
      %s80 = ssub.s32 %s77, %s78
      %s81 = sor.u32 %s79, %s80
      %p82 = scmp.eq.s32.totalorder %s81, 0
      %s84 = sadd.s32 %s83, 1
      %s85 = scalar_select %p82, %s83, %s84
      %p88 = pneg %p82
      %p89 = scmp.eq.s32.totalorder %s20, 1
      %p90 = por %p88, %p89
      %p91 = scmp.ne.s32.totalorder %s83, %s86
      %p92 = scmp.eq.s32.totalorder %s20, 0
      %p93 = por %p91, %p92
      %p94 = scmp.ne.s32.totalorder %s83, %s86
      %p95 = scmp.eq.s32.totalorder %s25, 1
      %p96 = por %p94, %p95
      %p97 = scmp.ne.s32.totalorder %s86, %s87
      %p98 = scmp.eq.s32.totalorder %s25, 0
      %p99 = por %p97, %p98
      %p100 = scmp.ne.s32.totalorder %s86, %s87
      %p101 = scmp.eq.s32.totalorder %s26, 1
      %p102 = por %p100, %p101
      %p104 = scmp.ne.s32.totalorder %s87, %s103
      %p105 = scmp.eq.s32.totalorder %s26, 0
      %p106 = por %p104, %p105
      %s108 = sadd.s32 %s107, 1
      %p111 = scmp.eq.s32.totalorder %s20, 1
      %p112 = scmp.ne.s32.totalorder %s107, %s109
      %p113 = scmp.eq.s32.totalorder %s20, 0
      %p114 = por %p112, %p113
      %p115 = scmp.ne.s32.totalorder %s107, %s109
      %p116 = scmp.eq.s32.totalorder %s25, 1
      %p117 = por %p115, %p116
      %p118 = scmp.ne.s32.totalorder %s109, %s110
      %p119 = scmp.eq.s32.totalorder %s25, 0
      %p120 = por %p118, %p119
      %p121 = scmp.ne.s32.totalorder %s109, %s110
      %p122 = scmp.eq.s32.totalorder %s26, 1
      %p123 = por %p121, %p122
      %p125 = scmp.ne.s32.totalorder %s110, %s124
      %p126 = scmp.eq.s32.totalorder %s26, 0
      %p127 = por %p125, %p126
      %s129 = sadd.s32 %s128, 1
      %p132 = scmp.eq.s32.totalorder %s20, 1
      %p133 = scmp.ne.s32.totalorder %s128, %s130
      %p134 = scmp.eq.s32.totalorder %s20, 0
      %p135 = por %p133, %p134
      %p136 = scmp.ne.s32.totalorder %s128, %s130
      %p137 = scmp.eq.s32.totalorder %s25, 1
      %p138 = por %p136, %p137
      %p139 = scmp.ne.s32.totalorder %s130, %s131
      %p140 = scmp.eq.s32.totalorder %s25, 0
      %p141 = por %p139, %p140
      %p142 = scmp.ne.s32.totalorder %s130, %s131
      %p143 = scmp.eq.s32.totalorder %s26, 1
      %p144 = por %p142, %p143
      %p146 = scmp.ne.s32.totalorder %s131, %s145
      %p147 = scmp.eq.s32.totalorder %s26, 0
      %p148 = por %p146, %p147
      %s149 = ssub.s32 %s27, %s46
      %p150 = scmp.eq.s32.totalorder %s149, 0
      %s152 = sadd.s32 %s151, 1
      %s153 = scalar_select %p150, %s151, %s152
      %p156 = pneg %p150
      %p157 = scmp.eq.s32.totalorder %s20, 1
      %p158 = por %p156, %p157
      %p159 = scmp.ne.s32.totalorder %s151, %s154
      %p160 = scmp.eq.s32.totalorder %s20, 0
      %p161 = por %p159, %p160
      %p162 = scmp.ne.s32.totalorder %s151, %s154
      %p163 = scmp.eq.s32.totalorder %s25, 1
      %p164 = por %p162, %p163
      %p165 = scmp.ne.s32.totalorder %s154, %s155
      %p166 = scmp.eq.s32.totalorder %s25, 0
      %p167 = por %p165, %p166
      %p168 = scmp.ne.s32.totalorder %s154, %s155
      %p169 = scmp.eq.s32.totalorder %s26, 1
      %p170 = por %p168, %p169
      %p172 = scmp.ne.s32.totalorder %s155, %s171
      %p173 = scmp.eq.s32.totalorder %s26, 0
      %p174 = por %p172, %p173
      %s175 = ssub.s32 %s27, %s46
      %p176 = scmp.eq.s32.totalorder %s175, 0
      %s178 = sadd.s32 %s177, 1
      %s179 = scalar_select %p176, %s177, %s178
      %p182 = pneg %p176
      %p183 = scmp.eq.s32.totalorder %s20, 1
      %p184 = por %p182, %p183
      %p185 = scmp.ne.s32.totalorder %s177, %s180
      %p186 = scmp.eq.s32.totalorder %s20, 0
      %p187 = por %p185, %p186
      %p188 = scmp.ne.s32.totalorder %s177, %s180
      %p189 = scmp.eq.s32.totalorder %s25, 1
      %p190 = por %p188, %p189
      %p191 = scmp.ne.s32.totalorder %s180, %s181
      %p192 = scmp.eq.s32.totalorder %s25, 0
      %p193 = por %p191, %p192
      %p194 = scmp.ne.s32.totalorder %s180, %s181
      %p195 = scmp.eq.s32.totalorder %s26, 1
      %p196 = por %p194, %p195
      %p198 = scmp.ne.s32.totalorder %s181, %s197
      %p199 = scmp.eq.s32.totalorder %s26, 0
      %p200 = por %p198, %p199
      %s201 = ssub.s32 %s27, %s46
      %p202 = scmp.eq.s32.totalorder %s201, 0
      %s204 = sadd.s32 %s203, 1
      %s205 = scalar_select %p202, %s203, %s204
      %p208 = pneg %p202
      %p209 = scmp.eq.s32.totalorder %s20, 1
      %p210 = por %p208, %p209
      %p211 = scmp.ne.s32.totalorder %s203, %s206
      %p212 = scmp.eq.s32.totalorder %s20, 0
      %p213 = por %p211, %p212
      %p214 = scmp.ne.s32.totalorder %s203, %s206
      %p215 = scmp.eq.s32.totalorder %s25, 1
      %p216 = por %p214, %p215
      %p217 = scmp.ne.s32.totalorder %s206, %s207
      %p218 = scmp.eq.s32.totalorder %s25, 0
      %p219 = por %p217, %p218
      %p220 = scmp.ne.s32.totalorder %s206, %s207
      %p221 = scmp.eq.s32.totalorder %s26, 1
      %p222 = por %p220, %p221
      %p224 = scmp.ne.s32.totalorder %s207, %s223
      %p225 = scmp.eq.s32.totalorder %s26, 0
      %p226 = por %p224, %p225
      %s227 = ssub.s32 %s27, %s46
      %p228 = scmp.eq.s32.totalorder %s227, 0
      %s230 = sadd.s32 %s229, 1
      %s231 = scalar_select %p228, %s229, %s230
      %p234 = pneg %p228
      %p235 = scmp.eq.s32.totalorder %s20, 1
      %p236 = por %p234, %p235
      %p237 = scmp.ne.s32.totalorder %s229, %s232
      %p238 = scmp.eq.s32.totalorder %s20, 0
      %p239 = por %p237, %p238
      %p240 = scmp.ne.s32.totalorder %s229, %s232
      %p241 = scmp.eq.s32.totalorder %s25, 1
      %p242 = por %p240, %p241
      %p243 = scmp.ne.s32.totalorder %s232, %s233
      %p244 = scmp.eq.s32.totalorder %s25, 0
      %p245 = por %p243, %p244
      %p246 = scmp.ne.s32.totalorder %s232, %s233
      %p247 = scmp.eq.s32.totalorder %s26, 1
      %p248 = por %p246, %p247
      %p250 = scmp.ne.s32.totalorder %s233, %s249
      %p251 = scmp.eq.s32.totalorder %s26, 0
      %p252 = por %p250, %p251
      %p253 = scmp.le.s32.totalorder 1, %s20
      %p254 = scmp.lt.s32.totalorder %s20, 3
      %p255 = pnand %p253, %p254
      %p256 = pneg %p255
      // Predicated region
      $region9: #{tpu_custom_call.1} parent=5 // pred_check
        _
      $region10: #{tpu_custom_call.1} parent=5 // pred_check_branch
        %258 = sbr.rel (%p255) target = $region12
      $region11: #{tpu_custom_call.1} parent=5 // pred_region
        %s259 = ssub.s32 %s20, 1
        // Predicated region
        $region13: #{tpu_custom_call.1} parent=11 // pred_check
          %p260 = pneg %p120
        $region14: #{tpu_custom_call.1} parent=11 // pred_check_branch
          %262 = sbr.rel (%p260) target = $region16
        $region15: #{tpu_custom_call.1} parent=11 // pred_region
          _
        $region16: #{tpu_custom_call.1} parent=11 // pred_fallthru
          _
        // Predicated region
        $region17: #{tpu_custom_call.1} parent=11 // pred_check
          %p263 = pneg %p141
        $region18: #{tpu_custom_call.1} parent=11 // pred_check_branch
          %265 = sbr.rel (%p263) target = $region20
        $region19: #{tpu_custom_call.1} parent=11 // pred_region
          _
        $region20: #{tpu_custom_call.1} parent=11 // pred_fallthru
          _
      $region12: #{tpu_custom_call.1} parent=5 // pred_fallthru
        _
      %p266 = scmp.lt.s32.totalorder %s20, 2
      // Predicated region
      $region21: #{tpu_custom_call.1} parent=5 // pred_check
        %p267 = pneg %p266
      $region22: #{tpu_custom_call.1} parent=5 // pred_check_branch
        %269 = sbr.rel (%p267) target = $region24
      $region23: #{tpu_custom_call.1} parent=5 // pred_region
        // Predicated region
        $region25: #{tpu_custom_call.1} parent=23 // pred_check
          %p270 = pneg %p63
        $region26: #{tpu_custom_call.1} parent=23 // pred_check_branch
          %272 = sbr.rel (%p270) target = $region28
        $region27: #{tpu_custom_call.1} parent=23 // pred_region
          %s273 = sadd.s32 %s27, %s29
          %s274 = smul.u32 2, %s273
          %p275 = scmp.lt.s32.totalorder %s28, 1
          %s276 = scalar_select %p275, %s28, 1
          %p277 = scmp.lt.s32.totalorder %s274, 1
          %s278 = scalar_select %p277, %s274, 1
          %s279 = smul.addr %s276, 2
          %s280 = sadd.s32 %s278, %s279
          %s281 = smul.addr %s280, 4
          %s282 = scalar_lea.vmem %s0, %s281
          %s283 = sadd.s32 %s27, %s29
          %s284 = smul.u32 2, %s283
        $region28: #{tpu_custom_call.1} parent=23 // pred_fallthru
          _
        // Predicated region
        $region29: #{tpu_custom_call.1} parent=23 // pred_check
          %p285 = pneg %p93
        $region30: #{tpu_custom_call.1} parent=23 // pred_check_branch
          %287 = sbr.rel (%p285) target = $region32
        $region31: #{tpu_custom_call.1} parent=23 // pred_region
          %s288 = sand.u32 %s83, 1
          %s289 = scalar_lea.sflag [#allocation3], %s288
          %s290 = sand.u32 %s83, 1
          %s291 = smul.addr %s290, 8
          %s292 = scalar_lea.vmem [#allocation2], %s291
          %s293 = sadd.s32 %s27, %s29
          %s294 = smul.u32 2, %s293
          %s296 = ssub.s32 128, 128
          %297 = vsyncadd %s289, %s296
          %s298 = smul.addr %s28, 2
          %s299 = sadd.s32 %s294, %s298
          %s300 = smul.addr %s299, 64
          %s301 = scalar_lea.hbm %s1, %s300
          %s303 = sshll.u32 %s292, 4
          %s304 = int_to_ptr.vmem [resolvable:$true] %s303
          %306 = dma.hbm_to_vmem [thread:$0]  %s301, 128, %s304, %s289
        $region32: #{tpu_custom_call.1} parent=23 // pred_fallthru
          _
      $region24: #{tpu_custom_call.1} parent=5 // pred_fallthru
        _
      %p307 = scmp.le.s32.totalorder 1, %s20
      %p308 = scmp.lt.s32.totalorder %s20, 3
      %p309 = pnand %p307, %p308
      %p310 = pneg %p309
      // Predicated region
      $region33: #{tpu_custom_call.1} parent=5 // pred_check
        _
      $region34: #{tpu_custom_call.1} parent=5 // pred_check_branch
        %312 = sbr.rel (%p309) target = $region36
      $region35: #{tpu_custom_call.1} parent=5 // pred_region
        %s313 = ssub.s32 %s20, 1
        %s314 = sand.u32 %s86, 1
        %s315 = scalar_lea.sflag [#allocation3], %s314
        %s316 = sand.u32 %s86, 1
        %s317 = smul.addr %s316, 8
        %s318 = scalar_lea.vmem [#allocation2], %s317
        // Predicated region
        $region37: #{tpu_custom_call.1} parent=35 // pred_check
          %p319 = pneg %p99
        $region38: #{tpu_custom_call.1} parent=35 // pred_check_branch
          %321 = sbr.rel (%p319) target = $region40
        $region39: #{tpu_custom_call.1} parent=35 // pred_region
          %322 = dma.done %s315, 128
        $region40: #{tpu_custom_call.1} parent=35 // pred_fallthru
          _
        %s323 = sadd.s32 %s30, %s32
        %s324 = smul.u32 2, %s323
        %p325 = scmp.lt.s32.totalorder %s31, 1
        %s326 = scalar_select %p325, %s31, 1
        %p327 = scmp.lt.s32.totalorder %s324, 1
        %s328 = scalar_select %p327, %s324, 1
        %s329 = smul.addr %s326, 2
        %s330 = sadd.s32 %s328, %s329
        %s331 = smul.addr %s330, 4
        %s332 = scalar_lea.vmem %s0, %s331
        %p333 = pneg %p69
        %p334 = pneg %p66
        %s335 = sand.u32 %s86, 1
        %s336 = scalar_lea.sflag [#allocation3], %s335
        %s337 = sand.u32 %s86, 1
        %s338 = smul.addr %s337, 8
        %s339 = scalar_lea.vmem [#allocation2], %s338
        %p340 = pneg %p99
        %p341 = pneg %p96
        %p342 = pneg %p120
        %p343 = pneg %p117
        %p344 = pneg %p141
        %p345 = pneg %p138
        %p346 = pneg %p167
        %p347 = pneg %p164
        %p348 = pneg %p193
        %p349 = pneg %p190
        %p350 = pneg %p219
        %p351 = pneg %p216
        %p352 = pneg %p245
        %p353 = pneg %p242
        %s354 = sadd.s32 %s30, %s32
        %s355 = smul.u32 2, %s354
        %p356 = scmp.lt.s32.totalorder %s31, 1
        %s357 = scalar_select %p356, %s31, 1
        %p358 = scmp.lt.s32.totalorder %s355, 1
        %s359 = scalar_select %p358, %s355, 1
        %s360 = smul.addr %s357, 2
        %s361 = sadd.s32 %s359, %s360
        %s362 = smul.addr %s361, 4
        %s363 = scalar_lea.vmem %s0, %s362
        %s364 = sadd.s32 %s30, %s32
        %s365 = smul.u32 2, %s364
        %s366 = sadd.s32 %s30, %s32
        %s367 = smul.u32 2, %s366
        %p368 = scmp.eq.s32.totalorder %s31, 0
        %p369 = scmp.eq.s32.totalorder %s32, 0
        %p370 = pnand %p368, %p369
        %p371 = pneg %p370
        // Predicated region
        $region41: #{tpu_custom_call.1} parent=35 // pred_check
          _
        $region42: #{tpu_custom_call.1} parent=35 // pred_check_branch
          %373 = sbr.rel (%p370) target = $region44
        $region43: #{tpu_custom_call.1} parent=35 // pred_region
          %374 = vst [vmem:[#allocation5] sm:$0xff] 0.0
          %375 = vst [vmem:[#allocation6] sm:$0xff] 0.0
          %376 = vst [vmem:[#allocation8] sm:$0xff] 0.0
          %377 = vst [vmem:[#allocation9] sm:$0xff] 0.0
        $region44: #{tpu_custom_call.1} parent=35 // pred_fallthru
          _
        %v378 = vld [vmem:[%s2] sm:$0xff]
        %v379 = vld [vmem:[%s363] sm:$0xff]
        %v381 = vcombine.high %v379, %v379
        %vm382 = vcmask 31744
        %v384 = vsel %vm382, %v378, 0
        %vm386 = vcmask 1043456
        %v387 = vsel %vm386, %v379, 0
        %v389 = vsel %vm386, %v381, 0
        %391 = vmatprep.subr.mxu0 %v389
        %392 = vmatpush1.msra.mxu0 %v387
        %393 = vmatprep.subr.mxu0 0.0
        %394 = vmatpush1.msra.mxu0 0.0
        %395 = vmatprep.subr.mxu0 0.0
        %396 = vmatpush1.msra.mxu0 0.0
        %397 = vmatprep.subr.mxu0 0.0
        %398 = vmatpush1.msra.mxu0 0.0
        %399 = vmatprep.subr.mxu0 0.0
        %400 = vmatpush1.msra.mxu0 0.0
        %401 = vmatprep.subr.mxu0 0.0
        %402 = vmatpush1.msra.mxu0 0.0
        %403 = vmatprep.subr.mxu0 0.0
        %404 = vmatpush1.msra.mxu0 0.0
        %405 = vmatprep.subr.mxu0 0.0
        %406 = vmatpush1.msra.mxu0 0.0
        %407 = vmatprep.subr.mxu0 0.0
        %408 = vmatpush1.msra.mxu0 0.0
        %409 = vmatprep.subr.mxu0 0.0
        %410 = vmatpush1.msra.mxu0 0.0
        %411 = vmatprep.subr.mxu0 0.0
        %412 = vmatpush1.msra.mxu0 0.0
        %413 = vmatprep.subr.mxu0 0.0
        %414 = vmatpush1.msra.mxu0 0.0
        %415 = vmatprep.subr.mxu0 0.0
        %416 = vmatpush1.msra.mxu0 0.0
        %417 = vmatprep.subr.mxu0 0.0
        %418 = vmatpush1.msra.mxu0 0.0
        %419 = vmatprep.subr.mxu0 0.0
        %420 = vmatpush1.msra.mxu0 0.0
        %421 = vmatprep.subr.mxu0 0.0
        %422 = vmatpush1.msra.mxu0 0.0
        %423 = vmatprep.subr.mxu0 0.0
        %424 = vmatpush1.msra.mxu0 0.0
        %425 = vmatprep.subr.mxu0 0.0
        %426 = vmatpush1.msra.mxu0 0.0
        %427 = vmatprep.subr.mxu0 0.0
        %428 = vmatpush1.msra.mxu0 0.0
        %429 = vmatprep.subr.mxu0 0.0
        %430 = vmatpush1.msra.mxu0 0.0
        %431 = vmatprep.subr.mxu0 0.0
        %432 = vmatpush1.msra.mxu0 0.0
        %433 = vmatprep.subr.mxu0 0.0
        %434 = vmatpush1.msra.mxu0 0.0
        %435 = vmatprep.subr.mxu0 0.0
        %436 = vmatpush1.msra.mxu0 0.0
        %437 = vmatprep.subr.mxu0 0.0
        %438 = vmatpush1.msra.mxu0 0.0
        %439 = vmatprep.subr.mxu0 0.0
        %440 = vmatpush1.msra.mxu0 0.0
        %441 = vmatprep.subr.mxu0 0.0
        %442 = vmatpush1.msra.mxu0 0.0
        %443 = vmatprep.subr.mxu0 0.0
        %444 = vmatpush1.msra.mxu0 0.0
        %445 = vmatprep.subr.mxu0 0.0
        %446 = vmatpush1.msra.mxu0 0.0
        %447 = vmatprep.subr.mxu0 0.0
        %448 = vmatpush1.msra.mxu0 0.0
        %449 = vmatprep.subr.mxu0 0.0
        %450 = vmatpush1.msra.mxu0 0.0
        %451 = vmatprep.subr.mxu0 0.0
        %452 = vmatpush1.msra.mxu0 0.0
        %453 = vmatprep.subr.mxu0 0.0
        %454 = vmatpush1.msra.mxu0 0.0
        %455 = vmatprep.mubr.f32.mxu0 0.0
        %456 = vmatmul.mubr.f32.gmra.mrb[0].mxu0 %v384
        %v457 = vpop.f32.mrb[0].mxu0
        %v458 = vadd.f32 0.0, %v457
        %v459 = vpop.f32.mrb[0].mxu0
        %v460 = vadd.f32 0.0, %v459
        %461 = vdwg.mxu0
        %v462 = vld [vmem:[%s3] sm:$0xff]
        %v463 = vld [vmem:[%s318] sm:$0xff]
        %v465 = vcombine.high %v463, %v463
        %v467 = vsel %vm382, %v462, 0
        %v469 = vsel %vm386, %v463, 0
        %v471 = vsel %vm386, %v465, 0
        %473 = vmatprep.subr.mxu0 %v471
        %474 = vmatpush1.msra.mxu0 %v469
        %475 = vmatprep.subr.mxu0 0.0
        %476 = vmatpush1.msra.mxu0 0.0
        %477 = vmatprep.subr.mxu0 0.0
        %478 = vmatpush1.msra.mxu0 0.0
        %479 = vmatprep.subr.mxu0 0.0
        %480 = vmatpush1.msra.mxu0 0.0
        %481 = vmatprep.subr.mxu0 0.0
        %482 = vmatpush1.msra.mxu0 0.0
        %483 = vmatprep.subr.mxu0 0.0
        %484 = vmatpush1.msra.mxu0 0.0
        %485 = vmatprep.subr.mxu0 0.0
        %486 = vmatpush1.msra.mxu0 0.0
        %487 = vmatprep.subr.mxu0 0.0
        %488 = vmatpush1.msra.mxu0 0.0
        %489 = vmatprep.subr.mxu0 0.0
        %490 = vmatpush1.msra.mxu0 0.0
        %491 = vmatprep.subr.mxu0 0.0
        %492 = vmatpush1.msra.mxu0 0.0
        %493 = vmatprep.subr.mxu0 0.0
        %494 = vmatpush1.msra.mxu0 0.0
        %495 = vmatprep.subr.mxu0 0.0
        %496 = vmatpush1.msra.mxu0 0.0
        %497 = vmatprep.subr.mxu0 0.0
        %498 = vmatpush1.msra.mxu0 0.0
        %499 = vmatprep.subr.mxu0 0.0
        %500 = vmatpush1.msra.mxu0 0.0
        %501 = vmatprep.subr.mxu0 0.0
        %502 = vmatpush1.msra.mxu0 0.0
        %503 = vmatprep.subr.mxu0 0.0
        %504 = vmatpush1.msra.mxu0 0.0
        %505 = vmatprep.subr.mxu0 0.0
        %506 = vmatpush1.msra.mxu0 0.0
        %507 = vmatprep.subr.mxu0 0.0
        %508 = vmatpush1.msra.mxu0 0.0
        %509 = vmatprep.subr.mxu0 0.0
        %510 = vmatpush1.msra.mxu0 0.0
        %511 = vmatprep.subr.mxu0 0.0
        %512 = vmatpush1.msra.mxu0 0.0
        %513 = vmatprep.subr.mxu0 0.0
        %514 = vmatpush1.msra.mxu0 0.0
        %515 = vmatprep.subr.mxu0 0.0
        %516 = vmatpush1.msra.mxu0 0.0
        %517 = vmatprep.subr.mxu0 0.0
        %518 = vmatpush1.msra.mxu0 0.0
        %519 = vmatprep.subr.mxu0 0.0
        %520 = vmatpush1.msra.mxu0 0.0
        %521 = vmatprep.subr.mxu0 0.0
        %522 = vmatpush1.msra.mxu0 0.0
        %523 = vmatprep.subr.mxu0 0.0
        %524 = vmatpush1.msra.mxu0 0.0
        %525 = vmatprep.subr.mxu0 0.0
        %526 = vmatpush1.msra.mxu0 0.0
        %527 = vmatprep.subr.mxu0 0.0
        %528 = vmatpush1.msra.mxu0 0.0
        %529 = vmatprep.subr.mxu0 0.0
        %530 = vmatpush1.msra.mxu0 0.0
        %531 = vmatprep.subr.mxu0 0.0
        %532 = vmatpush1.msra.mxu0 0.0
        %533 = vmatprep.subr.mxu0 0.0
        %534 = vmatpush1.msra.mxu0 0.0
        %535 = vmatprep.subr.mxu0 0.0
        %536 = vmatpush1.msra.mxu0 0.0
        %537 = vmatprep.mubr.f32.mxu0 0.0
        %538 = vmatmul.mubr.f32.gmra.mrb[0].mxu0 %v467
        %v539 = vpop.f32.mrb[0].mxu0
        %v540 = vadd.f32 0.0, %v539
        %v541 = vpop.f32.mrb[0].mxu0
        %v542 = vadd.f32 0.0, %v541
        %543 = vdwg.mxu0
        %v544 = vld [vmem:[#allocation5] sm:$0xff]
        %v545 = vadd.f32 %v458, %v460
        %v546 = vadd.f32 %v544, %v545
        %547 = vst [vmem:[#allocation5] sm:$0xff] %v546
        %v548 = vld [vmem:[#allocation6] sm:$0xff]
        %v549 = vmul.f32 %v458, %v458
        %v550 = vmul.f32 %v460, %v460
        %v551 = vadd.f32 %v549, %v550
        %v552 = vadd.f32 %v548, %v551
        %553 = vst [vmem:[#allocation6] sm:$0xff] %v552
        %v554 = vld [vmem:[#allocation8] sm:$0xff]
        %v555 = vadd.f32 %v540, %v542
        %v556 = vadd.f32 %v554, %v555
        %557 = vst [vmem:[#allocation8] sm:$0xff] %v556
        %v558 = vld [vmem:[#allocation9] sm:$0xff]
        %v559 = vmul.f32 %v540, %v540
        %v560 = vmul.f32 %v542, %v542
        %v561 = vadd.f32 %v559, %v560
        %v562 = vadd.f32 %v558, %v561
        %563 = vst [vmem:[#allocation9] sm:$0xff] %v562
        // Predicated region
        $region45: #{tpu_custom_call.1} parent=35 // pred_check
          %p564 = pneg %p164
        $region46: #{tpu_custom_call.1} parent=35 // pred_check_branch
          %566 = sbr.rel (%p564) target = $region48
        $region47: #{tpu_custom_call.1} parent=35 // pred_region
          %s568 = ssub.s32 128, 128
          %569 = vsyncadd [#allocation4], %s568
          %s570 = smul.addr %s30, 128
          %s571 = scalar_lea.hbm %s4, %s570
          %s573 = sshll.u32 [#allocation5], 4
          %s574 = int_to_ptr.vmem [resolvable:$true] %s573
          %576 = dma.vmem_to_hbm [thread:$0]  %s574, 128, %s571, [#allocation4]
        $region48: #{tpu_custom_call.1} parent=35 // pred_fallthru
          _
        // Predicated region
        $region49: #{tpu_custom_call.1} parent=35 // pred_check
          %p577 = pneg %p190
        $region50: #{tpu_custom_call.1} parent=35 // pred_check_branch
          %579 = sbr.rel (%p577) target = $region52
        $region51: #{tpu_custom_call.1} parent=35 // pred_region
          %s581 = ssub.s32 128, 128
          %582 = vsyncadd [#allocation7], %s581
          %s583 = smul.addr %s30, 128
          %s584 = scalar_lea.hbm %s5, %s583
          %s586 = sshll.u32 [#allocation6], 4
          %s587 = int_to_ptr.vmem [resolvable:$true] %s586
          %589 = dma.vmem_to_hbm [thread:$0]  %s587, 128, %s584, [#allocation7]
        $region52: #{tpu_custom_call.1} parent=35 // pred_fallthru
          _
        // Predicated region
        $region53: #{tpu_custom_call.1} parent=35 // pred_check
          %p590 = pneg %p216
        $region54: #{tpu_custom_call.1} parent=35 // pred_check_branch
          %592 = sbr.rel (%p590) target = $region56
        $region55: #{tpu_custom_call.1} parent=35 // pred_region
          %s594 = ssub.s32 128, 128
          %595 = vsyncadd [#allocation7], %s594
          %s596 = smul.addr %s30, 128
          %s597 = scalar_lea.hbm %s6, %s596
          %s599 = sshll.u32 [#allocation8], 4
          %s600 = int_to_ptr.vmem [resolvable:$true] %s599
          %602 = dma.vmem_to_hbm [thread:$0]  %s600, 128, %s597, [#allocation7]
        $region56: #{tpu_custom_call.1} parent=35 // pred_fallthru
          _
        // Predicated region
        $region57: #{tpu_custom_call.1} parent=35 // pred_check
          %p603 = pneg %p242
        $region58: #{tpu_custom_call.1} parent=35 // pred_check_branch
          %605 = sbr.rel (%p603) target = $region60
        $region59: #{tpu_custom_call.1} parent=35 // pred_region
          %s607 = ssub.s32 128, 128
          %608 = vsyncadd [#allocation10], %s607
          %s609 = smul.addr %s30, 128
          %s610 = scalar_lea.hbm %s7, %s609
          %s612 = sshll.u32 [#allocation9], 4
          %s613 = int_to_ptr.vmem [resolvable:$true] %s612
          %615 = dma.vmem_to_hbm [thread:$0]  %s613, 128, %s610, [#allocation10]
        $region60: #{tpu_custom_call.1} parent=35 // pred_fallthru
          _
        // Predicated region
        $region61: #{tpu_custom_call.1} parent=35 // pred_check
          %p616 = pneg %p164
        $region62: #{tpu_custom_call.1} parent=35 // pred_check_branch
          %618 = sbr.rel (%p616) target = $region64
        $region63: #{tpu_custom_call.1} parent=35 // pred_region
          %619 = dma.done [#allocation4], 128
        $region64: #{tpu_custom_call.1} parent=35 // pred_fallthru
          _
        // Predicated region
        $region65: #{tpu_custom_call.1} parent=35 // pred_check
          %p620 = pneg %p190
        $region66: #{tpu_custom_call.1} parent=35 // pred_check_branch
          %622 = sbr.rel (%p620) target = $region68
        $region67: #{tpu_custom_call.1} parent=35 // pred_region
          %623 = dma.done [#allocation7], 128
        $region68: #{tpu_custom_call.1} parent=35 // pred_fallthru
          _
        // Predicated region
        $region69: #{tpu_custom_call.1} parent=35 // pred_check
          %p624 = pneg %p216
        $region70: #{tpu_custom_call.1} parent=35 // pred_check_branch
          %626 = sbr.rel (%p624) target = $region72
        $region71: #{tpu_custom_call.1} parent=35 // pred_region
          %627 = dma.done [#allocation7], 128
        $region72: #{tpu_custom_call.1} parent=35 // pred_fallthru
          _
        // Predicated region
        $region73: #{tpu_custom_call.1} parent=35 // pred_check
          %p628 = pneg %p242
        $region74: #{tpu_custom_call.1} parent=35 // pred_check_branch
          %630 = sbr.rel (%p628) target = $region76
        $region75: #{tpu_custom_call.1} parent=35 // pred_region
          %631 = dma.done [#allocation10], 128
        $region76: #{tpu_custom_call.1} parent=35 // pred_fallthru
          _
      $region36: #{tpu_custom_call.1} parent=5 // pred_fallthru
        _
      %p632 = scmp.le.s32.totalorder 2, %s20
      // Predicated region
      $region77: #{tpu_custom_call.1} parent=5 // pred_check
        %p633 = pneg %p632
      $region78: #{tpu_custom_call.1} parent=5 // pred_check_branch
        %635 = sbr.rel (%p633) target = $region80
      $region79: #{tpu_custom_call.1} parent=5 // pred_region
        %s636 = ssub.s32 %s20, 2
      $region80: #{tpu_custom_call.1} parent=5 // pred_fallthru
        _
    $region6: #{tpu_custom_call.1} parent=1 // loop_footer
      %s24 = sadd.s32 1, %s20
    $region7: #{tpu_custom_call.1} parent=1 // loop_footer_branch
      %19 = sbr.rel target = $region3
    $region8: #{tpu_custom_call.1} parent=1 // loop_exit
      _
    %637 = vsyncpa [#allocation3], 1
    %s638 = scalar_lea.sflag [#allocation3], 1
    %639 = vsyncpa %s638, 1
    %640 = vsyncpa [#allocation4], 1
    %s641 = scalar_lea.sflag [#allocation4], 1
    %642 = vsyncpa %s641, 1
    %643 = vsyncpa [#allocation7], 1
    %644 = vsyncpa [#allocation10], 1

</llo_original>
